<compile_context>
chip_gen: v7x
topology: tpu7x:2x2x1
jax: 0.10.0
libtpu: 0.0.40
codegen_flags: <defaults>
</compile_context>

<pallas_src>
import functools

import jax
import jax.numpy as jnp
from jax.experimental import pallas as pl
from jax.experimental.pallas import tpu as pltpu


def _round_up(a: int, b: int) -> int:
    return (a + b - 1) // b * b


def _device_kind() -> str:
    try:
        return jax.devices()[0].device_kind.lower()
    except Exception:
        return ""


def _sublane_pack(dtype) -> int:
    # f32/i32: 8, bf16/f16: 16, 8-bit: 32 (sub-32-bit dtypes pack along sublanes).
    return {1: 32, 2: 16}.get(jnp.dtype(dtype).itemsize, 8)


def _wmse_kernel(x_ref, t_ref, w_ref, o_ref, *,
                 rows, tile_rows, tiles_per_chunk, masked):
    """Accumulate weight * (x - t)^2, sublane-group reduced, into the (8, L) output block."""
    j = pl.program_id(1)

    @pl.when(j == 0)
    def _init():
        o_ref[...] = jnp.zeros_like(o_ref)

    # Cast in-kernel so bf16/fp16 callers stream native-width bytes over HBM.
    x = x_ref[...].astype(jnp.float32)
    t = t_ref[...].astype(jnp.float32)
    w = w_ref[...].astype(jnp.float32)
    d = x - t
    contrib = w * d * d

    if masked:
        # Static flag: only emitted when rows does not tile evenly.  Row-mask the
        # ragged/phantom region; where() selects, so undefined boundary data
        # (even NaN/Inf) contributes exactly zero.
        g = pl.program_id(0) * tiles_per_chunk + j
        row_start = g * tile_rows
        row_ids = jax.lax.broadcasted_iota(jnp.int32, contrib.shape, 0)
        contrib = jnp.where(row_ids < (rows - row_start), contrib, 0.0)

    lane_cols = contrib.shape[1]
    # Small (8, lane_cols) accumulator: per-step sublane-group reduce instead of
    # reading/writing a full 2 MiB accumulator tile every step.
    o_ref[...] += contrib.reshape(tile_rows // 8, 8, lane_cols).sum(axis=0)


def weighted_mse_loss(inp, target, weight):
    """mean(weight * (inp - target)**2) via a Pallas TPU kernel."""
    assert inp.shape == target.shape == weight.shape
    n = inp.size

    x = inp.reshape(-1)
    t = target.reshape(-1)
    w = weight.reshape(-1)

    # Widest lane count that divides n -> zero-copy 2D reshape (no jnp.pad).
    lane_cols = None
    for c in (1024, 512, 256, 128):
        if n % c == 0 and n >= c:
            lane_cols = c
            break
    if lane_cols is None:
        lane_cols = 1024
    tail = n % lane_cols
    n_main = n - tail

    tail_sum = jnp.float32(0.0)
    if tail:
        # Tiny (<1024 element) plain-JAX epilogue for the non-128-aligned tail.
        xt = x[n_main:].astype(jnp.float32)
        tt = t[n_main:].astype(jnp.float32)
        wt = w[n_main:].astype(jnp.float32)
        tail_sum = jnp.sum(wt * (xt - tt) ** 2, dtype=jnp.float32)

    if n_main == 0:
        return tail_sum / jnp.float32(n)

    if tail:
        # TODO(synk): only non-128-aligned sizes pay this one prefix slice; a fully
        # zero-copy path would need 1-D blocks / manual DMA from a raw HBM ref.
        x, t, w = x[:n_main], t[:n_main], w[:n_main]

    rows = n_main // lane_cols
    x2 = x.reshape(rows, lane_cols)
    t2 = t.reshape(rows, lane_cols)
    w2 = w.reshape(rows, lane_cols)

    # ---- generation-aware tiling / chunking --------------------------------
    kind = _device_kind()
    if "v7" in kind:
        base_rows, num_chunks = 1024, 2          # 64 MiB VMEM, 2 TensorCores
    elif "v6" in kind:
        base_rows, num_chunks = 1024, 1          # 1 TC, plenty of VMEM
    else:
        base_rows, num_chunks = 512, 1           # v5e / unknown: conservative
        if "v5p" in kind or "v4" in kind:
            num_chunks = 2                       # dual-TC megacore chips

    pack = max(_sublane_pack(a.dtype) for a in (inp, target, weight))
    target_rows = base_rows * (1024 // lane_cols)          # ~constant bytes per tile
    tile_rows = min(_round_up(rows, pack), _round_up(target_rows, pack))

    tiles_total = pl.cdiv(rows, tile_rows)
    num_chunks = max(1, min(num_chunks, tiles_total))
    tiles_per_chunk = pl.cdiv(tiles_total, num_chunks)
    masked = (num_chunks * tiles_per_chunk * tile_rows) != rows
    has_phantom = (num_chunks * tiles_per_chunk) != tiles_total
    last_tile = tiles_total - 1

    def in_index(i, j):
        g = i * tiles_per_chunk + j
        if has_phantom:
            g = jnp.minimum(g, last_tile)   # keep phantom-tile DMAs in bounds (masked to 0)
        return (g, 0)

    def out_index(i, j):
        return (i, 0)

    bytes_per_step = tile_rows * lane_cols * sum(
        jnp.dtype(a.dtype).itemsize for a in (x2, t2, w2))
    vmem_limit = int(min(max(2 * bytes_per_step + (8 << 20), 16 << 20), 56 << 20))

    kernel = functools.partial(
        _wmse_kernel, rows=rows, tile_rows=tile_rows,
        tiles_per_chunk=tiles_per_chunk, masked=masked)

    partials = pl.pallas_call(
        kernel,
        out_shape=jax.ShapeDtypeStruct((num_chunks * 8, lane_cols), jnp.float32),
        grid=(num_chunks, tiles_per_chunk),
        in_specs=[pl.BlockSpec((tile_rows, lane_cols), in_index)] * 3,
        out_specs=pl.BlockSpec((8, lane_cols), out_index),
        compiler_params=pltpu.CompilerParams(
            dimension_semantics=("parallel", "arbitrary"),
            vmem_limit_bytes=vmem_limit,
        ),
    )(x2, t2, w2)

    # Tiny final cross-lane/per-chunk reduction in plain JAX.
    return (jnp.sum(partials, dtype=jnp.float32) + tail_sum) / jnp.float32(n)


if __name__ == "__main__":
    key = jax.random.PRNGKey(0)
    loss_fn = jax.jit(weighted_mse_loss)

    # Case 1: lane-aligned NCHW-like shape (2*4*16*16 = 2048 elements).
    # Case 2: odd, non-128-aligned shape to exercise the ragged-row mask + tail epilogue.
    cases = [(2, 4, 16, 16), (3, 5, 17, 13)]
    for idx, shape in enumerate(cases):
        k1, k2, k3 = jax.random.split(jax.random.fold_in(key, idx), 3)
        inp = jax.random.normal(k1, shape, dtype=jnp.float32)
        target = jax.random.normal(k2, shape, dtype=jnp.float32)
        weight = jax.random.uniform(k3, shape, dtype=jnp.float32)

        loss = loss_fn(inp, target, weight)
        jax.block_until_ready(loss)

        ref = jnp.mean(weight * (inp - target) ** 2)
        assert jnp.allclose(loss, ref, rtol=1e-5, atol=1e-6), (shape, loss, ref)

    print("KERNEL_OK")
</pallas_src>

<mosaic_0001>
module attributes {stable_mosaic.version = 11 : i64} {
  func.func @_wmse_kernel(%arg0: i32, %arg1: i32, %arg2: memref<8x1024xf32, #tpu.memory_space<vmem>>, %arg3: memref<8x1024xf32, #tpu.memory_space<vmem>>, %arg4: memref<8x1024xf32, #tpu.memory_space<vmem>>, %arg5: memref<8x1024xf32, #tpu.memory_space<vmem>>) attributes {dimension_semantics = [#tpu.dimension_semantics<parallel>, #tpu.dimension_semantics<arbitrary>], iteration_bounds = array<i64: 1, 1>, scalar_prefetch = 0 : i64, scratch_operands = 0 : i64, tpu.core_type = #tpu.core_type<tc>, window_params = [{transform_indices = @transform_0, window_bounds = array<i64: 8, 1024>}, {transform_indices = @transform_1, window_bounds = array<i64: 8, 1024>}, {transform_indices = @transform_2, window_bounds = array<i64: 8, 1024>}, {transform_indices = @transform_3, window_bounds = array<i64: 8, 1024>}]} {
    %c0_i32 = arith.constant 0 : i32
    %0 = arith.cmpi eq, %arg1, %c0_i32 : i32
    %1 = arith.extui %0 : i1 to i32
    %c0_i32_0 = arith.constant 0 : i32
    %2 = arith.cmpi ne, %1, %c0_i32_0 : i32
    scf.if %2 {
      %cst_11 = arith.constant 0.000000e+00 : f32
      %23 = vector.broadcast %cst_11 : f32 to vector<8x1024xf32>
      %c0_12 = arith.constant 0 : index
      %c0_13 = arith.constant 0 : index
      %24 = vector.load %arg5[%c0_12, %c0_13] : memref<8x1024xf32, #tpu.memory_space<vmem>>, vector<8x1024xf32>
      tpu.vector_store %arg5[%c0_12, %c0_13], %23 {strides = array<i32>} : memref<8x1024xf32, #tpu.memory_space<vmem>>, vector<8x1024xf32>,
    } else {
    }
    %c0 = arith.constant 0 : index
    %c0_1 = arith.constant 0 : index
    %3 = vector.load %arg2[%c0, %c0_1] : memref<8x1024xf32, #tpu.memory_space<vmem>>, vector<8x1024xf32>
    %c0_2 = arith.constant 0 : index
    %c0_3 = arith.constant 0 : index
    %4 = vector.load %arg3[%c0_2, %c0_3] : memref<8x1024xf32, #tpu.memory_space<vmem>>, vector<8x1024xf32>
    %c0_4 = arith.constant 0 : index
    %c0_5 = arith.constant 0 : index
    %5 = vector.load %arg4[%c0_4, %c0_5] : memref<8x1024xf32, #tpu.memory_space<vmem>>, vector<8x1024xf32>
    %6 = arith.subf %3, %4 : vector<8x1024xf32>
    %7 = arith.mulf %5, %6 : vector<8x1024xf32>
    %8 = arith.mulf %7, %6 : vector<8x1024xf32>
    %c1_i32 = arith.constant 1 : i32
    %9 = arith.muli %arg0, %c1_i32 : i32
    %10 = arith.addi %9, %arg1 : i32
    %c8_i32 = arith.constant 8 : i32
    %11 = arith.muli %10, %c8_i32 : i32
    %12 = tpu.iota {dimensions = array<i32: 0>} : vector<8x1024xi32>
    %c2_i32 = arith.constant 2 : i32
    %13 = arith.subi %c2_i32, %11 : i32
    %14 = vector.broadcast %13 : i32 to vector<8x1024xi32>
    %15 = arith.cmpi slt, %12, %14 : vector<8x1024xi32>
    %cst = arith.constant 0.000000e+00 : f32
    %16 = vector.broadcast %cst : f32 to vector<8x1024xf32>
    %17 = arith.select %15, %8, %16 : vector<8x1024xi1>, vector<8x1024xf32>
    %c0_6 = arith.constant 0 : index
    %c0_7 = arith.constant 0 : index
    %18 = vector.load %arg5[%c0_6, %c0_7] : memref<8x1024xf32, #tpu.memory_space<vmem>>, vector<8x1024xf32>
    %19 = vector.shape_cast %17 : vector<8x1024xf32> to vector<1x8x1024xf32>
    %cst_8 = arith.constant dense<0.000000e+00> : vector<8x1024xf32>
    %20 = vector.multi_reduction <add>, %19, %cst_8 [0] : vector<1x8x1024xf32> to vector<8x1024xf32>
    %21 = arith.addf %18, %20 : vector<8x1024xf32>
    %c0_9 = arith.constant 0 : index
    %c0_10 = arith.constant 0 : index
    %22 = vector.load %arg5[%c0_9, %c0_10] : memref<8x1024xf32, #tpu.memory_space<vmem>>, vector<8x1024xf32>
    tpu.vector_store %arg5[%c0_9, %c0_10], %21 {strides = array<i32>} : memref<8x1024xf32, #tpu.memory_space<vmem>>, vector<8x1024xf32>,
    return
  }
  func.func @transform_0(%arg0: i32, %arg1: i32) -> (i32, i32) {
    %c1_i32 = arith.constant 1 : i32
    %0 = arith.muli %arg0, %c1_i32 : i32
    %1 = arith.addi %0, %arg1 : i32
    %c0_i32 = arith.constant 0 : i32
    %c0_i32_0 = arith.constant 0 : i32
    return %1, %c0_i32 : i32, i32
  }
  func.func @transform_1(%arg0: i32, %arg1: i32) -> (i32, i32) {
    %c1_i32 = arith.constant 1 : i32
    %0 = arith.muli %arg0, %c1_i32 : i32
    %1 = arith.addi %0, %arg1 : i32
    %c0_i32 = arith.constant 0 : i32
    %c0_i32_0 = arith.constant 0 : i32
    return %1, %c0_i32 : i32, i32
  }
  func.func @transform_2(%arg0: i32, %arg1: i32) -> (i32, i32) {
    %c1_i32 = arith.constant 1 : i32
    %0 = arith.muli %arg0, %c1_i32 : i32
    %1 = arith.addi %0, %arg1 : i32
    %c0_i32 = arith.constant 0 : i32
    %c0_i32_0 = arith.constant 0 : i32
    return %1, %c0_i32 : i32, i32
  }
  func.func @transform_3(%arg0: i32, %arg1: i32) -> (i32, i32) {
    %c0_i32 = arith.constant 0 : i32
    %c0_i32_0 = arith.constant 0 : i32
    return %arg0, %c0_i32 : i32, i32
  }
}

</mosaic_0001>

<llo_original>
// kernel: weighted_mse_loss.1
$region0: #{weighted_mse_loss.1}
  #allocation0 [shape = 'u32[]', space=smem, size = 0x4, offset = 0x4, fixed_abs, tag = 'smem constant byte address 0x4 - core index']
  #allocation1 [shape = 'u32[144,128]{1,0:T(1,128)}', space=vmem, size = 0x12000, scoped, tag = 'internal scratch']
  %s0 = inlined_call_operand.vmem [shape: f32[2,1024], index: 0, kind: input, shape index: {}]
  %s1 = inlined_call_operand.vmem [shape: f32[2,1024], index: 1, kind: input, shape index: {}]
  %s2 = inlined_call_operand.vmem [shape: f32[2,1024], index: 2, kind: input, shape index: {}]
  %s3 = inlined_call_operand.vmem [shape: f32[8,1024], index: 3, kind: output, shape index: {}]
  %s4 = sld [smem:[#allocation0]]
  $region26: #{weighted_mse_loss.1} parent=0
    _
  %s6 = ssub.s32 1, %s4
  %s7 = scalar_select 0, %s6, %s4
  // Predicated region
  $region2: #{weighted_mse_loss.1} parent=0 // pred_check
    _
  $region3: #{weighted_mse_loss.1} parent=0 // pred_check_branch
    %9 = sbr.rel (0) target = $region5
  $region4: #{weighted_mse_loss.1} parent=0 // pred_region
    %s10 = sadd.s32 0, 0
    %s11 = smul.u32 4, %s10
    %s12 = ssub.s32 1, %s11
    %s13 = smul.u32 32, %s12
    %s14 = smul.u32 %s13, 8
    %p15 = scmp.lt.s32.totalorder %s11, 0
    %s16 = scalar_select %p15, %s11, 0
    %s17 = smul.addr %s16, 8
    %s18 = smul.addr %s17, 2
    %s19 = scalar_lea.vmem %s0, %s18
    %s20 = sadd.s32 0, 0
    %s21 = smul.u32 4, %s20
    %s22 = ssub.s32 1, %s21
    %s23 = smul.u32 32, %s22
    %s24 = smul.u32 %s23, 8
  $region5: #{weighted_mse_loss.1} parent=0 // pred_fallthru
    _
  // Predicated region
  $region6: #{weighted_mse_loss.1} parent=0 // pred_check
    _
  $region7: #{weighted_mse_loss.1} parent=0 // pred_check_branch
    %26 = sbr.rel (0) target = $region9
  $region8: #{weighted_mse_loss.1} parent=0 // pred_region
    %s27 = sadd.s32 0, 0
    %s28 = smul.u32 4, %s27
    %s29 = ssub.s32 1, %s28
    %s30 = smul.u32 32, %s29
    %s31 = smul.u32 %s30, 8
    %p32 = scmp.lt.s32.totalorder %s28, 0
    %s33 = scalar_select %p32, %s28, 0
    %s34 = smul.addr %s33, 8
    %s35 = smul.addr %s34, 2
    %s36 = scalar_lea.vmem %s1, %s35
    %s37 = sadd.s32 0, 0
    %s38 = smul.u32 4, %s37
    %s39 = ssub.s32 1, %s38
    %s40 = smul.u32 32, %s39
    %s41 = smul.u32 %s40, 8
  $region9: #{weighted_mse_loss.1} parent=0 // pred_fallthru
    _
  // Predicated region
  $region10: #{weighted_mse_loss.1} parent=0 // pred_check
    _
  $region11: #{weighted_mse_loss.1} parent=0 // pred_check_branch
    %43 = sbr.rel (0) target = $region13
  $region12: #{weighted_mse_loss.1} parent=0 // pred_region
    %s44 = sadd.s32 0, 0
    %s45 = smul.u32 4, %s44
    %s46 = ssub.s32 1, %s45
    %s47 = smul.u32 32, %s46
    %s48 = smul.u32 %s47, 8
    %p49 = scmp.lt.s32.totalorder %s45, 0
    %s50 = scalar_select %p49, %s45, 0
    %s51 = smul.addr %s50, 8
    %s52 = smul.addr %s51, 2
    %s53 = scalar_lea.vmem %s2, %s52
    %s54 = sadd.s32 0, 0
    %s55 = smul.u32 4, %s54
    %s56 = ssub.s32 1, %s55
    %s57 = smul.u32 32, %s56
    %s58 = smul.u32 %s57, 8
  $region13: #{weighted_mse_loss.1} parent=0 // pred_fallthru
    _
  %s59 = sadd.s32 0, 0
  %s60 = smul.u32 4, %s59
  %s61 = ssub.s32 1, %s60
  %s62 = smul.u32 32, %s61
  %s63 = smul.u32 %s62, 8
  %p64 = scmp.lt.s32.totalorder %s60, 0
  %s65 = scalar_select %p64, %s60, 0
  %s66 = smul.addr %s65, 8
  %s67 = smul.addr %s66, 2
  %s68 = scalar_lea.vmem %s0, %s67
  %s69 = sadd.s32 0, 0
  %s70 = smul.u32 4, %s69
  %s71 = ssub.s32 1, %s70
  %s72 = smul.u32 32, %s71
  %s73 = smul.u32 %s72, 8
  %p74 = scmp.lt.s32.totalorder %s70, 0
  %s75 = scalar_select %p74, %s70, 0
  %s76 = smul.addr %s75, 8
  %s77 = smul.addr %s76, 2
  %s78 = scalar_lea.vmem %s1, %s77
  %s79 = sadd.s32 0, 0
  %s80 = smul.u32 4, %s79
  %s81 = ssub.s32 1, %s80
  %s82 = smul.u32 32, %s81
  %s83 = smul.u32 %s82, 8
  %p84 = scmp.lt.s32.totalorder %s80, 0
  %s85 = scalar_select %p84, %s80, 0
  %s86 = smul.addr %s85, 8
  %s87 = smul.addr %s86, 2
  %s88 = scalar_lea.vmem %s2, %s87
  %s89 = sadd.s32 0, 0
  %s90 = smul.u32 4, %s89
  %s91 = ssub.s32 1, %s90
  %s92 = smul.u32 32, %s91
  %s93 = smul.u32 %s92, 8
  %p94 = scmp.lt.s32.totalorder %s90, 0
  %s95 = scalar_select %p94, %s90, 0
  %s96 = smul.addr %s95, 8
  %s97 = smul.addr %s96, 2
  %s98 = scalar_lea.vmem %s0, %s97
  %s99 = sadd.s32 0, 0
  %s100 = smul.u32 4, %s99
  %s101 = ssub.s32 1, %s100
  %s102 = smul.u32 32, %s101
  %s103 = smul.u32 %s102, 8
  %s104 = sadd.s32 0, 0
  %s105 = smul.u32 4, %s104
  %s106 = ssub.s32 1, %s105
  %s107 = smul.u32 32, %s106
  %s108 = smul.u32 %s107, 8
  %p109 = scmp.lt.s32.totalorder %s105, 0
  %s110 = scalar_select %p109, %s105, 0
  %s111 = smul.addr %s110, 8
  %s112 = smul.addr %s111, 2
  %s113 = scalar_lea.vmem %s1, %s112
  %s114 = sadd.s32 0, 0
  %s115 = smul.u32 4, %s114
  %s116 = ssub.s32 1, %s115
  %s117 = smul.u32 32, %s116
  %s118 = smul.u32 %s117, 8
  %s119 = sadd.s32 0, 0
  %s120 = smul.u32 4, %s119
  %s121 = ssub.s32 1, %s120
  %s122 = smul.u32 32, %s121
  %s123 = smul.u32 %s122, 8
  %p124 = scmp.lt.s32.totalorder %s120, 0
  %s125 = scalar_select %p124, %s120, 0
  %s126 = smul.addr %s125, 8
  %s127 = smul.addr %s126, 2
  %s128 = scalar_lea.vmem %s2, %s127
  %s129 = sadd.s32 0, 0
  %s130 = smul.u32 4, %s129
  %s131 = ssub.s32 1, %s130
  %s132 = smul.u32 32, %s131
  %s133 = smul.u32 %s132, 8
  %p134 = scmp.eq.s32.totalorder 0, 0
  // Predicated region
  $region14: #{weighted_mse_loss.1} parent=0 // pred_check
    %p135 = pneg %p134
  $region15: #{weighted_mse_loss.1} parent=0 // pred_check_branch
    %137 = sbr.rel (%p135) target = $region17
  $region16: #{weighted_mse_loss.1} parent=0 // pred_region
    %138 = vst [vmem:[%s3] sm:$0xff] 0.0
    %139 = vst [vmem:[%s3 + $0x8] sm:$0xff] 0.0
    %140 = vst [vmem:[%s3 + $0x10] sm:$0xff] 0.0
    %141 = vst [vmem:[%s3 + $0x18] sm:$0xff] 0.0
    %142 = vst [vmem:[%s3 + $0x20] sm:$0xff] 0.0
    %143 = vst [vmem:[%s3 + $0x28] sm:$0xff] 0.0
    %144 = vst [vmem:[%s3 + $0x30] sm:$0xff] 0.0
    %145 = vst [vmem:[%s3 + $0x38] sm:$0xff] 0.0
  $region17: #{weighted_mse_loss.1} parent=0 // pred_fallthru
    _
  %v146 = vld [vmem:[%s98] sm:$0xff]
  %v147 = vld [vmem:[%s98 + $0x8] sm:$0xff]
  %v148 = vld [vmem:[%s98 + $0x10] sm:$0xff]
  %v149 = vld [vmem:[%s98 + $0x18] sm:$0xff]
  %v150 = vld [vmem:[%s98 + $0x20] sm:$0xff]
  %v151 = vld [vmem:[%s98 + $0x28] sm:$0xff]
  %v152 = vld [vmem:[%s98 + $0x30] sm:$0xff]
  %v153 = vld [vmem:[%s98 + $0x38] sm:$0xff]
  %v154 = vld [vmem:[%s113] sm:$0xff]
  %v155 = vld [vmem:[%s113 + $0x8] sm:$0xff]
  %v156 = vld [vmem:[%s113 + $0x10] sm:$0xff]
  %v157 = vld [vmem:[%s113 + $0x18] sm:$0xff]
  %v158 = vld [vmem:[%s113 + $0x20] sm:$0xff]
  %v159 = vld [vmem:[%s113 + $0x28] sm:$0xff]
  %v160 = vld [vmem:[%s113 + $0x30] sm:$0xff]
  %v161 = vld [vmem:[%s113 + $0x38] sm:$0xff]
  %v162 = vld [vmem:[%s128] sm:$0xff]
  %v163 = vld [vmem:[%s128 + $0x8] sm:$0xff]
  %v164 = vld [vmem:[%s128 + $0x10] sm:$0xff]
  %v165 = vld [vmem:[%s128 + $0x18] sm:$0xff]
  %v166 = vld [vmem:[%s128 + $0x20] sm:$0xff]
  %v167 = vld [vmem:[%s128 + $0x28] sm:$0xff]
  %v168 = vld [vmem:[%s128 + $0x30] sm:$0xff]
  %v169 = vld [vmem:[%s128 + $0x38] sm:$0xff]
  %v170 = vsub.f32 %v146, %v154
  %v171 = vsub.f32 %v147, %v155
  %v172 = vsub.f32 %v148, %v156
  %v173 = vsub.f32 %v149, %v157
  %v174 = vsub.f32 %v150, %v158
  %v175 = vsub.f32 %v151, %v159
  %v176 = vsub.f32 %v152, %v160
  %v177 = vsub.f32 %v153, %v161
  %v178 = vmul.f32 %v162, %v170
  %v179 = vmul.f32 %v163, %v171
  %v180 = vmul.f32 %v164, %v172
  %v181 = vmul.f32 %v165, %v173
  %v182 = vmul.f32 %v166, %v174
  %v183 = vmul.f32 %v167, %v175
  %v184 = vmul.f32 %v168, %v176
  %v185 = vmul.f32 %v169, %v177
  %v186 = vmul.f32 %v178, %v170
  %v187 = vmul.f32 %v179, %v171
  %v188 = vmul.f32 %v180, %v172
  %v189 = vmul.f32 %v181, %v173
  %v190 = vmul.f32 %v182, %v174
  %v191 = vmul.f32 %v183, %v175
  %v192 = vmul.f32 %v184, %v176
  %v193 = vmul.f32 %v185, %v177
  %s194 = sadd.s32 0, 0
  %s195 = smul.u32 %s194, 8
  %v196 = vlaneseq
  %v197 = vshrl.u32 %v196, 7
  %s198 = ssub.s32 2, %s195
  %v199 = vstv %s198
  %vm200 = vcmp.lt.s32.totalorder %v197, %v199
  %v209 = vcombine.low %v186, %v188
  %v210 = vcombine.high %v186, %v188
  %v211 = vcombine.low %v190, %v192
  %v212 = vcombine.high %v190, %v192
  %v214 = vunpack.c.l.s4 1983009808
  %v215 = vunpack.c.0.s8 %v214
  %v216 = vlaneseq
  %v217 = vshrl.u32 %v216, 7
  %v218 = vsub.s32 %v215, %v217
  %v219 = vrot.slane %v209, %v218
  %v221 = vunpack.c.l.s4 1983009808
  %v222 = vunpack.c.0.s8 %v221
  %v223 = vlaneseq
  %v224 = vshrl.u32 %v223, 7
  %v225 = vsub.s32 %v222, %v224
  %v226 = vrot.slane %v210, %v225
  %v228 = vunpack.c.l.s4 1983009808
  %v229 = vunpack.c.0.s8 %v228
  %v230 = vlaneseq
  %v231 = vshrl.u32 %v230, 7
  %v232 = vsub.s32 %v229, %v231
  %v233 = vrot.slane %v211, %v232
  %v235 = vunpack.c.l.s4 1983009808
  %v236 = vunpack.c.0.s8 %v235
  %v237 = vlaneseq
  %v238 = vshrl.u32 %v237, 7
  %v239 = vsub.s32 %v236, %v238
  %v240 = vrot.slane %v212, %v239
  %v241 = vcombine.low %v219, %v233
  %v242 = vcombine.high %v219, %v233
  %v243 = vcombine.low %v226, %v240
  %v244 = vcombine.high %v226, %v240
  %v245 = vcombine.low %v187, %v189
  %v246 = vcombine.high %v187, %v189
  %v247 = vcombine.low %v191, %v193
  %v248 = vcombine.high %v191, %v193
  %v250 = vunpack.c.l.s4 1983009808
  %v251 = vunpack.c.0.s8 %v250
  %v252 = vlaneseq
  %v253 = vshrl.u32 %v252, 7
  %v254 = vsub.s32 %v251, %v253
  %v255 = vrot.slane %v245, %v254
  %v257 = vunpack.c.l.s4 1983009808
  %v258 = vunpack.c.0.s8 %v257
  %v259 = vlaneseq
  %v260 = vshrl.u32 %v259, 7
  %v261 = vsub.s32 %v258, %v260
  %v262 = vrot.slane %v246, %v261
  %v264 = vunpack.c.l.s4 1983009808
  %v265 = vunpack.c.0.s8 %v264
  %v266 = vlaneseq
  %v267 = vshrl.u32 %v266, 7
  %v268 = vsub.s32 %v265, %v267
  %v269 = vrot.slane %v247, %v268
  %v271 = vunpack.c.l.s4 1983009808
  %v272 = vunpack.c.0.s8 %v271
  %v273 = vlaneseq
  %v274 = vshrl.u32 %v273, 7
  %v275 = vsub.s32 %v272, %v274
  %v276 = vrot.slane %v248, %v275
  %v277 = vcombine.low %v255, %v269
  %v278 = vcombine.high %v255, %v269
  %v279 = vcombine.low %v262, %v276
  %v280 = vcombine.high %v262, %v276
  %v289 = vsel %vm200, %v241, 0.0
  %v290 = vsel %vm200, %v242, 0.0
  %v291 = vsel %vm200, %v243, 0.0
  %v292 = vsel %vm200, %v244, 0.0
  %v293 = vsel %vm200, %v277, 0.0
  %v294 = vsel %vm200, %v278, 0.0
  %v295 = vsel %vm200, %v279, 0.0
  %v296 = vsel %vm200, %v280, 0.0
  %v297 = vld [vmem:[%s3] sm:$0xff]
  %v298 = vld [vmem:[%s3 + $0x8] sm:$0xff]
  %v299 = vld [vmem:[%s3 + $0x10] sm:$0xff]
  %v300 = vld [vmem:[%s3 + $0x18] sm:$0xff]
  %v301 = vld [vmem:[%s3 + $0x20] sm:$0xff]
  %v302 = vld [vmem:[%s3 + $0x28] sm:$0xff]
  %v303 = vld [vmem:[%s3 + $0x30] sm:$0xff]
  %v304 = vld [vmem:[%s3 + $0x38] sm:$0xff]
  %v305 = vadd.f32 %v289, 0.0
  %v306 = vadd.f32 %v290, 0.0
  %v307 = vadd.f32 %v291, 0.0
  %v308 = vadd.f32 %v292, 0.0
  %v309 = vadd.f32 %v293, 0.0
  %v310 = vadd.f32 %v294, 0.0
  %v311 = vadd.f32 %v295, 0.0
  %v312 = vadd.f32 %v296, 0.0
  %v313 = vadd.f32 %v297, %v305
  %v314 = vadd.f32 %v298, %v306
  %v315 = vadd.f32 %v299, %v307
  %v316 = vadd.f32 %v300, %v308
  %v317 = vadd.f32 %v301, %v309
  %v318 = vadd.f32 %v302, %v310
  %v319 = vadd.f32 %v303, %v311
  %v320 = vadd.f32 %v304, %v312
  %321 = vst [vmem:[%s3] sm:$0xff] %v313
  %322 = vst [vmem:[%s3 + $0x8] sm:$0xff] %v314
  %323 = vst [vmem:[%s3 + $0x10] sm:$0xff] %v315
  %324 = vst [vmem:[%s3 + $0x18] sm:$0xff] %v316
  %325 = vst [vmem:[%s3 + $0x20] sm:$0xff] %v317
  %326 = vst [vmem:[%s3 + $0x28] sm:$0xff] %v318
  %327 = vst [vmem:[%s3 + $0x30] sm:$0xff] %v319
  %328 = vst [vmem:[%s3 + $0x38] sm:$0xff] %v320
  // Predicated region
  $region18: #{weighted_mse_loss.1} parent=0 // pred_check
    _
  $region19: #{weighted_mse_loss.1} parent=0 // pred_check_branch
    %330 = sbr.rel (0) target = $region21
  $region20: #{weighted_mse_loss.1} parent=0 // pred_region
    _
  $region21: #{weighted_mse_loss.1} parent=0 // pred_fallthru
    _
  // Predicated region
  $region22: #{weighted_mse_loss.1} parent=0 // pred_check
    _
  $region23: #{weighted_mse_loss.1} parent=0 // pred_check_branch
    %332 = sbr.rel (0) target = $region25
  $region24: #{weighted_mse_loss.1} parent=0 // pred_region
    _
  $region25: #{weighted_mse_loss.1} parent=0 // pred_fallthru
    _

</llo_original>
